<compile_context>
chip_gen: v6e
topology: v6e:2x2x1
jax: 0.10.0
libtpu: 0.0.40
codegen_flags: <defaults>
</compile_context>

<pallas_src>
import functools

import jax
import jax.numpy as jnp
import numpy as np
from jax.experimental import pallas as pl
from jax.experimental.pallas import tpu as pltpu


def _conv_stats_kernel(wt_ref, patches_ref, y_ref, s1_ref, s2_ref):
    """Pass 1: phase-folded ConvTranspose2d matmul + per-row BN partial sums.

    wt_ref      : (Cout*4, 9*Cin) bf16   phase-folded weight (resident)
    patches_ref : (9*Cin, TN)     bf16   im2col tile, lane-dense pixels
    y_ref       : (Cout*4, TN)    f32    pre-BN conv output tile
    s1_ref      : (Cout*4, 1)     f32    per-row sum          (grid accumulator)
    s2_ref      : (Cout*4, 1)     f32    per-row sum-of-sq    (grid accumulator)
    """
    @pl.when(pl.program_id(0) == 0)
    def _init():
        s1_ref[...] = jnp.zeros_like(s1_ref)
        s2_ref[...] = jnp.zeros_like(s2_ref)

    # One MXU matmul, contraction depth 9*Cin, f32 accumulation.  Store the tile
    # immediately (the out-block's VMEM buffer is the staging area), then stream
    # it back for the tiny per-row reductions so only small temporaries stay live.
    y_ref[...] = jnp.dot(wt_ref[...], patches_ref[...],
                         preferred_element_type=jnp.float32)
    y = y_ref[...]
    s1_ref[...] += jnp.sum(y, axis=1, keepdims=True)
    s2_ref[...] += jnp.sum(y * y, axis=1, keepdims=True)


def _bn_act_kernel(y_ref, scale_ref, shift_ref, out_ref, *, negative_slope):
    """Pass 2: out = y * scale + shift (per-row broadcast) + LeakyReLU."""
    o = y_ref[...] * scale_ref[...] + shift_ref[...]
    # nn.LeakyReLU(True): first positional arg is negative_slope -> slope 1.0,
    # i.e. identity; the compare/select is compiled out at the default call.
    if negative_slope != 1.0:
        o = jnp.where(o >= 0, o, negative_slope * o)
    out_ref[...] = o


def _pick_tile_n(npix, target):
    """Largest multiple-of-128 divisor of npix that is <= target (else full)."""
    if npix <= target:
        return npix
    tn = (target // 128) * 128
    while tn >= 128 and npix % tn != 0:
        tn -= 128
    return tn if (tn >= 128 and npix % tn == 0) else npix


def _fold_weight(w_t, cout, cin):
    """Phase-fold the ConvTranspose2d weight into a (Cout*4, 9*Cin) bf16 matrix.

    Rows = (co, py, px), cols = (ey, ex, ci) over the 3x3 input neighbourhood.
    Single einsum with a constant 0/1 selector; cheap, hoistable per weight update.
    """
    # S[p, e, k] = 1 iff xpad row-offset tap e feeds output parity p via kernel row k.
    S = np.zeros((2, 3, 4), np.float32)
    S[0, 0, 3] = S[0, 1, 1] = S[1, 1, 2] = S[1, 2, 0] = 1.0
    S = jnp.asarray(S)
    wt6 = jnp.einsum('aek,bfl,ickl->cabefi', S, S, w_t.astype(jnp.float32))
    return wt6.reshape(cout * 4, 9 * cin).astype(jnp.bfloat16)


def upblock_forward(x_nchw, w_t, gamma, beta, *, negative_slope=1.0, eps=1e-5,
                    tile_n=8192):
    """UpBlock forward.

    x_nchw: (N, Cin, H, W)     -- NCHW input
    w_t   : (Cin, Cout, 4, 4)  -- ConvTranspose2d weight (PyTorch layout)
    gamma, beta: (Cout,)       -- BatchNorm2d affine params
    returns: (N, Cout, 2H, 2W) -- NCHW output, float32
    """
    N, Cin, H, W = x_nchw.shape
    cin_w, Cout, K, K2 = w_t.shape
    assert K == 4 and K2 == 4 and cin_w == Cin, "UpBlock uses k=4, s=2, p=1"
    OH, OW = 2 * H, 2 * W
    npix = N * H * W
    nrows = Cout * 4

    wt = _fold_weight(w_t, Cout, Cin)                          # (Cout*4, 9*Cin) bf16

    # Lane-dense im2col of the 3x3 neighbourhood, staged directly in bf16.
    # Every output pixel of every phase is covered by these 9 taps (taps a phase
    # does not use have zero folded weights).
    xpad = jnp.pad(x_nchw.astype(jnp.bfloat16), ((0, 0), (0, 0), (1, 1), (1, 1)))
    taps = [xpad[:, :, ey:ey + H, ex:ex + W]
            for ey in range(3) for ex in range(3)]             # each (N, Cin, H, W)
    patches = (jnp.stack(taps, axis=0)                         # (9, N, Cin, H, W)
               .transpose(0, 2, 1, 3, 4)                       # (9, Cin, N, H, W)
               .reshape(9 * Cin, npix))                        # (9*Cin, N*H*W) bf16

    # Pixel-axis tiling: ~8K lanes fits v5e's 16 MiB / v7x's 64 MiB budgets with
    # double buffering; raise tile_n on v6e if desired.
    tn = _pick_tile_n(npix, tile_n)
    ntiles = npix // tn

    # ---- pass 1: conv matmul + per-row BN partial sums (accumulated over grid) ----
    y, s1, s2 = pl.pallas_call(
        _conv_stats_kernel,
        out_shape=(jax.ShapeDtypeStruct((nrows, npix), jnp.float32),
                   jax.ShapeDtypeStruct((nrows, 1), jnp.float32),
                   jax.ShapeDtypeStruct((nrows, 1), jnp.float32)),
        grid=(ntiles,),
        in_specs=[pl.BlockSpec((nrows, 9 * Cin), lambda i: (0, 0)),   # resident weight
                  pl.BlockSpec((9 * Cin, tn), lambda i: (0, i))],     # pixel tiles
        out_specs=(pl.BlockSpec((nrows, tn), lambda i: (0, i)),
                   pl.BlockSpec((nrows, 1), lambda i: (0, 0)),        # accumulator
                   pl.BlockSpec((nrows, 1), lambda i: (0, 0))),       # accumulator
        compiler_params=pltpu.CompilerParams(
            dimension_semantics=("arbitrary",),
            vmem_limit_bytes=32 * 1024 * 1024),
    )(wt, patches)

    # ---- tiny cross-tile BN combine (per channel over all 4 phases x npix) ----
    m = jnp.float32(npix * 4)                                  # = N * OH * OW
    s1c = jnp.sum(s1.reshape(Cout, 4), axis=1)
    s2c = jnp.sum(s2.reshape(Cout, 4), axis=1)
    mean = s1c / m
    var = jnp.maximum(s2c / m - mean * mean, 0.0)              # clamp cancellation
    inv_std = jax.lax.rsqrt(var + eps)
    scale = gamma.astype(jnp.float32) * inv_std                # (Cout,)
    shift = beta.astype(jnp.float32) - mean * scale
    scale_rows = jnp.repeat(scale, 4).reshape(nrows, 1)        # per (co, phase) row
    shift_rows = jnp.repeat(shift, 4).reshape(nrows, 1)

    # ---- pass 2: normalize + activation (pixel axis parallel -> v7x megacore) ----
    out_flat = pl.pallas_call(
        functools.partial(_bn_act_kernel, negative_slope=negative_slope),
        out_shape=jax.ShapeDtypeStruct((nrows, npix), jnp.float32),
        grid=(ntiles,),
        in_specs=[pl.BlockSpec((nrows, tn), lambda i: (0, i)),
                  pl.BlockSpec((nrows, 1), lambda i: (0, 0)),
                  pl.BlockSpec((nrows, 1), lambda i: (0, 0))],
        out_specs=pl.BlockSpec((nrows, tn), lambda i: (0, i)),
        compiler_params=pltpu.CompilerParams(
            dimension_semantics=("parallel",),
            vmem_limit_bytes=32 * 1024 * 1024),
    )(y, scale_rows, shift_rows)

    # (co, py, px, n, j, i) -> (n, co, j, py, i, px) -> NCHW pixel-shuffle.
    out = out_flat.reshape(Cout, 2, 2, N, H, W)
    out = jnp.transpose(out, (3, 0, 4, 1, 5, 2)).reshape(N, Cout, OH, OW)
    return out


def _reference_numpy(x, w_t, gamma, beta, eps=1e-5, negative_slope=1.0):
    """Plain numpy (float64) reference of the PyTorch UpBlock forward (train mode)."""
    x = np.asarray(x, np.float64)
    w_t = np.asarray(w_t, np.float64)
    N, Cin, H, W = x.shape
    _, Cout, K, _ = w_t.shape
    OH, OW = 2 * H, 2 * W
    out_pad = np.zeros((N, Cout, OH + 2, OW + 2), np.float64)
    for ky in range(K):
        for kx in range(K):
            out_pad[:, :, ky:ky + 2 * H:2, kx:kx + 2 * W:2] += np.einsum(
                'nihw,io->nohw', x, w_t[:, :, ky, kx])
    conv = out_pad[:, :, 1:1 + OH, 1:1 + OW]                   # crop by padding=1
    mean = conv.mean(axis=(0, 2, 3), keepdims=True)
    var = conv.var(axis=(0, 2, 3), keepdims=True)              # biased variance
    y = (conv - mean) / np.sqrt(var + eps)
    y = y * np.asarray(gamma).reshape(1, -1, 1, 1) + np.asarray(beta).reshape(1, -1, 1, 1)
    return np.where(y >= 0, y, negative_slope * y)


if __name__ == "__main__":
    # Small shapes consistent with the module: batch=2, in=8, out=4, spatial=8x8.
    N, Cin, Cout, H, W, K = 2, 8, 4, 8, 8, 4

    key = jax.random.PRNGKey(0)
    kx_key, kw_key, kg_key, kb_key = jax.random.split(key, 4)
    x = jax.random.normal(kx_key, (N, Cin, H, W), jnp.float32)

    bound = 1.0 / np.sqrt(Cin * K * K)
    w_t = jax.random.uniform(kw_key, (Cin, Cout, K, K), jnp.float32,
                             minval=-bound, maxval=bound)
    gamma = 1.0 + 0.1 * jax.random.normal(kg_key, (Cout,), jnp.float32)
    beta = 0.1 * jax.random.normal(kb_key, (Cout,), jnp.float32)

    fwd = jax.jit(upblock_forward)
    out = jax.block_until_ready(fwd(x, w_t, gamma, beta))
    assert out.shape == (N, Cout, 2 * H, 2 * W), out.shape

    # The kernel feeds the MXU bf16 operands (with f32 accumulation), so compare
    # against the float64 reference evaluated on bf16-rounded inputs.
    x_bf = np.asarray(jnp.asarray(x).astype(jnp.bfloat16).astype(jnp.float32))
    w_bf = np.asarray(jnp.asarray(w_t).astype(jnp.bfloat16).astype(jnp.float32))
    ref = _reference_numpy(x_bf, w_bf, np.asarray(gamma), np.asarray(beta))
    np.testing.assert_allclose(np.asarray(out), ref, rtol=2e-3, atol=2e-3)

    print("KERNEL_OK")
</pallas_src>

<mosaic_0001>
module attributes {stable_mosaic.version = 11 : i64} {
  func.func @_conv_stats_kernel(%arg0: i32, %arg1: memref<16x72xbf16, #tpu.memory_space<vmem>>, %arg2: memref<72x128xbf16, #tpu.memory_space<vmem>>, %arg3: memref<16x128xf32, #tpu.memory_space<vmem>>, %arg4: memref<16x1xf32, #tpu.memory_space<vmem>>, %arg5: memref<16x1xf32, #tpu.memory_space<vmem>>) attributes {dimension_semantics = [#tpu.dimension_semantics<arbitrary>], iteration_bounds = array<i64: 1>, scalar_prefetch = 0 : i64, scratch_operands = 0 : i64, tpu.core_type = #tpu.core_type<tc>, window_params = [{pipeline_mode = #tpu.pipeline_mode<synchronous>, transform_indices = @transform_0, window_bounds = array<i64: 16, 72>}, {transform_indices = @transform_1, window_bounds = array<i64: 72, 128>}, {transform_indices = @transform_2, window_bounds = array<i64: 16, 128>}, {pipeline_mode = #tpu.pipeline_mode<synchronous>, transform_indices = @transform_3, window_bounds = array<i64: 16, 1>}, {pipeline_mode = #tpu.pipeline_mode<synchronous>, transform_indices = @transform_4, window_bounds = array<i64: 16, 1>}]} {
    %c0_i32 = arith.constant 0 : i32
    %0 = arith.cmpi eq, %arg0, %c0_i32 : i32
    %1 = arith.extui %0 : i1 to i32
    %c0_i32_0 = arith.constant 0 : i32
    %2 = arith.cmpi ne, %1, %c0_i32_0 : i32
    scf.if %2 {
      %cst_18 = arith.constant 0.000000e+00 : f32
      %19 = vector.broadcast %cst_18 : f32 to vector<16x1xf32>
      %c0_19 = arith.constant 0 : index
      %c0_20 = arith.constant 0 : index
      %20 = vector.load %arg4[%c0_19, %c0_20] : memref<16x1xf32, #tpu.memory_space<vmem>>, vector<16x1xf32>
      tpu.vector_store %arg4[%c0_19, %c0_20], %19 {strides = array<i32>} : memref<16x1xf32, #tpu.memory_space<vmem>>, vector<16x1xf32>,
      %cst_21 = arith.constant 0.000000e+00 : f32
      %21 = vector.broadcast %cst_21 : f32 to vector<16x1xf32>
      %c0_22 = arith.constant 0 : index
      %c0_23 = arith.constant 0 : index
      %22 = vector.load %arg5[%c0_22, %c0_23] : memref<16x1xf32, #tpu.memory_space<vmem>>, vector<16x1xf32>
      tpu.vector_store %arg5[%c0_22, %c0_23], %21 {strides = array<i32>} : memref<16x1xf32, #tpu.memory_space<vmem>>, vector<16x1xf32>,
    } else {
    }
    %c0 = arith.constant 0 : index
    %c0_1 = arith.constant 0 : index
    %3 = vector.load %arg1[%c0, %c0_1] : memref<16x72xbf16, #tpu.memory_space<vmem>>, vector<16x72xbf16>
    %c0_2 = arith.constant 0 : index
    %c0_3 = arith.constant 0 : index
    %4 = vector.load %arg2[%c0_2, %c0_3] : memref<72x128xbf16, #tpu.memory_space<vmem>>, vector<72x128xbf16>
    %cst = arith.constant dense<0.000000e+00> : vector<16x128xf32>
    %5 = tpu.matmul %3, %4, %cst {dimension_numbers = #tpu.dot_dimension_numbers<[1], [0], [0], [1], [0, 0, 1, 1], [], []>} : vector<16x72xbf16>, vector<72x128xbf16>, vector<16x128xf32> -> vector<16x128xf32>
    %c0_4 = arith.constant 0 : index
    %c0_5 = arith.constant 0 : index
    %6 = vector.load %arg3[%c0_4, %c0_5] : memref<16x128xf32, #tpu.memory_space<vmem>>, vector<16x128xf32>
    tpu.vector_store %arg3[%c0_4, %c0_5], %5 {strides = array<i32>} : memref<16x128xf32, #tpu.memory_space<vmem>>, vector<16x128xf32>,
    %c0_6 = arith.constant 0 : index
    %c0_7 = arith.constant 0 : index
    %7 = vector.load %arg3[%c0_6, %c0_7] : memref<16x128xf32, #tpu.memory_space<vmem>>, vector<16x128xf32>
    %c0_8 = arith.constant 0 : index
    %c0_9 = arith.constant 0 : index
    %8 = vector.load %arg4[%c0_8, %c0_9] : memref<16x1xf32, #tpu.memory_space<vmem>>, vector<16x1xf32>
    %cst_10 = arith.constant dense<0.000000e+00> : vector<16xf32>
    %9 = vector.multi_reduction <add>, %7, %cst_10 [1] : vector<16x128xf32> to vector<16xf32>
    %10 = vector.shape_cast %9 : vector<16xf32> to vector<16x1xf32>
    %11 = arith.addf %8, %10 : vector<16x1xf32>
    %c0_11 = arith.constant 0 : index
    %c0_12 = arith.constant 0 : index
    %12 = vector.load %arg4[%c0_11, %c0_12] : memref<16x1xf32, #tpu.memory_space<vmem>>, vector<16x1xf32>
    tpu.vector_store %arg4[%c0_11, %c0_12], %11 {strides = array<i32>} : memref<16x1xf32, #tpu.memory_space<vmem>>, vector<16x1xf32>,
    %c0_13 = arith.constant 0 : index
    %c0_14 = arith.constant 0 : index
    %13 = vector.load %arg5[%c0_13, %c0_14] : memref<16x1xf32, #tpu.memory_space<vmem>>, vector<16x1xf32>
    %14 = arith.mulf %7, %7 : vector<16x128xf32>
    %cst_15 = arith.constant dense<0.000000e+00> : vector<16xf32>
    %15 = vector.multi_reduction <add>, %14, %cst_15 [1] : vector<16x128xf32> to vector<16xf32>
    %16 = vector.shape_cast %15 : vector<16xf32> to vector<16x1xf32>
    %17 = arith.addf %13, %16 : vector<16x1xf32>
    %c0_16 = arith.constant 0 : index
    %c0_17 = arith.constant 0 : index
    %18 = vector.load %arg5[%c0_16, %c0_17] : memref<16x1xf32, #tpu.memory_space<vmem>>, vector<16x1xf32>
    tpu.vector_store %arg5[%c0_16, %c0_17], %17 {strides = array<i32>} : memref<16x1xf32, #tpu.memory_space<vmem>>, vector<16x1xf32>,
    return
  }
  func.func @transform_0(%arg0: i32) -> (i32, i32) {
    %c0_i32 = arith.constant 0 : i32
    %c0_i32_0 = arith.constant 0 : i32
    %c0_i32_1 = arith.constant 0 : i32
    return %c0_i32, %c0_i32_0 : i32, i32
  }
  func.func @transform_1(%arg0: i32) -> (i32, i32) {
    %c0_i32 = arith.constant 0 : i32
    %c0_i32_0 = arith.constant 0 : i32
    return %c0_i32, %arg0 : i32, i32
  }
  func.func @transform_2(%arg0: i32) -> (i32, i32) {
    %c0_i32 = arith.constant 0 : i32
    %c0_i32_0 = arith.constant 0 : i32
    return %c0_i32, %arg0 : i32, i32
  }
  func.func @transform_3(%arg0: i32) -> (i32, i32) {
    %c0_i32 = arith.constant 0 : i32
    %c0_i32_0 = arith.constant 0 : i32
    %c0_i32_1 = arith.constant 0 : i32
    return %c0_i32, %c0_i32_0 : i32, i32
  }
  func.func @transform_4(%arg0: i32) -> (i32, i32) {
    %c0_i32 = arith.constant 0 : i32
    %c0_i32_0 = arith.constant 0 : i32
    %c0_i32_1 = arith.constant 0 : i32
    return %c0_i32, %c0_i32_0 : i32, i32
  }
}

module attributes {stable_mosaic.version = 11 : i64} {
  func.func @_bn_act_kernel(%arg0: i32, %arg1: memref<16x128xf32, #tpu.memory_space<vmem>>, %arg2: memref<16x1xf32, #tpu.memory_space<vmem>>, %arg3: memref<16x1xf32, #tpu.memory_space<vmem>>, %arg4: memref<16x128xf32, #tpu.memory_space<vmem>>) attributes {dimension_semantics = [#tpu.dimension_semantics<parallel>], iteration_bounds = array<i64: 1>, scalar_prefetch = 0 : i64, scratch_operands = 0 : i64, tpu.core_type = #tpu.core_type<tc>, window_params = [{transform_indices = @transform_0, window_bounds = array<i64: 16, 128>}, {pipeline_mode = #tpu.pipeline_mode<synchronous>, transform_indices = @transform_1, window_bounds = array<i64: 16, 1>}, {pipeline_mode = #tpu.pipeline_mode<synchronous>, transform_indices = @transform_2, window_bounds = array<i64: 16, 1>}, {transform_indices = @transform_3, window_bounds = array<i64: 16, 128>}]} {
    %c0 = arith.constant 0 : index
    %c0_0 = arith.constant 0 : index
    %0 = vector.load %arg1[%c0, %c0_0] : memref<16x128xf32, #tpu.memory_space<vmem>>, vector<16x128xf32>
    %c0_1 = arith.constant 0 : index
    %c0_2 = arith.constant 0 : index
    %1 = vector.load %arg2[%c0_1, %c0_2] : memref<16x1xf32, #tpu.memory_space<vmem>>, vector<16x1xf32>
    %2 = vector.broadcast %1 : vector<16x1xf32> to vector<16x128xf32>
    %3 = arith.mulf %0, %2 : vector<16x128xf32>
    %c0_3 = arith.constant 0 : index
    %c0_4 = arith.constant 0 : index
    %4 = vector.load %arg3[%c0_3, %c0_4] : memref<16x1xf32, #tpu.memory_space<vmem>>, vector<16x1xf32>
    %5 = vector.broadcast %4 : vector<16x1xf32> to vector<16x128xf32>
    %6 = arith.addf %3, %5 : vector<16x128xf32>
    %c0_5 = arith.constant 0 : index
    %c0_6 = arith.constant 0 : index
    %7 = vector.load %arg4[%c0_5, %c0_6] : memref<16x128xf32, #tpu.memory_space<vmem>>, vector<16x128xf32>
    tpu.vector_store %arg4[%c0_5, %c0_6], %6 {strides = array<i32>} : memref<16x128xf32, #tpu.memory_space<vmem>>, vector<16x128xf32>,
    return
  }
  func.func @transform_0(%arg0: i32) -> (i32, i32) {
    %c0_i32 = arith.constant 0 : i32
    %c0_i32_0 = arith.constant 0 : i32
    return %c0_i32, %arg0 : i32, i32
  }
  func.func @transform_1(%arg0: i32) -> (i32, i32) {
    %c0_i32 = arith.constant 0 : i32
    %c0_i32_0 = arith.constant 0 : i32
    %c0_i32_1 = arith.constant 0 : i32
    return %c0_i32, %c0_i32_0 : i32, i32
  }
  func.func @transform_2(%arg0: i32) -> (i32, i32) {
    %c0_i32 = arith.constant 0 : i32
    %c0_i32_0 = arith.constant 0 : i32
    %c0_i32_1 = arith.constant 0 : i32
    return %c0_i32, %c0_i32_0 : i32, i32
  }
  func.func @transform_3(%arg0: i32) -> (i32, i32) {
    %c0_i32 = arith.constant 0 : i32
    %c0_i32_0 = arith.constant 0 : i32
    return %c0_i32, %arg0 : i32, i32
  }
}

</mosaic_0001>

<llo_original>
// kernel: upblock_forward.3
$region0: #{upblock_forward.3}
  #allocation0 [shape = 'u32[]', space=smem, size = 0x4, offset = 0x4, fixed_abs, tag = 'smem constant byte address 0x4 - core index']
  #allocation1 [shape = 'u32[144,128]{1,0:T(1,128)}', space=vmem, size = 0x12000, scoped, tag = 'internal scratch']
  %s0 = inlined_call_operand.vmem [shape: f32[16,128], index: 0, kind: input, shape index: {}]
  %s1 = inlined_call_operand.vmem [shape: f32[16,1], index: 1, kind: input, shape index: {}]
  %s2 = inlined_call_operand.vmem [shape: f32[16,1], index: 2, kind: input, shape index: {}]
  %s3 = inlined_call_operand.vmem [shape: f32[16,128], index: 3, kind: output, shape index: {}]
  %s4 = sld [smem:[#allocation0]]
  $region22: #{upblock_forward.3} parent=0
    _
  %s6 = ssub.s32 1, %s4
  %s7 = scalar_select 0, %s6, %s4
  // Predicated region
  $region2: #{upblock_forward.3} parent=0 // pred_check
    _
  $region3: #{upblock_forward.3} parent=0 // pred_check_branch
    %9 = sbr.rel (0) target = $region5
  $region4: #{upblock_forward.3} parent=0 // pred_region
    _
  $region5: #{upblock_forward.3} parent=0 // pred_fallthru
    _
  // Predicated region
  $region6: #{upblock_forward.3} parent=0 // pred_check
    _
  $region7: #{upblock_forward.3} parent=0 // pred_check_branch
    %11 = sbr.rel (0) target = $region9
  $region8: #{upblock_forward.3} parent=0 // pred_region
    _
  $region9: #{upblock_forward.3} parent=0 // pred_fallthru
    _
  // Predicated region
  $region10: #{upblock_forward.3} parent=0 // pred_check
    _
  $region11: #{upblock_forward.3} parent=0 // pred_check_branch
    %13 = sbr.rel (0) target = $region13
  $region12: #{upblock_forward.3} parent=0 // pred_region
    _
  $region13: #{upblock_forward.3} parent=0 // pred_fallthru
    _
  %v14 = vld [vmem:[%s0] sm:$0xff]
  %v15 = vld [vmem:[%s0 + $0x8] sm:$0xff]
  %v16 = vld [vmem:[%s1] sm:$0xff]
  %v17 = vld [vmem:[%s1 + $0x8] sm:$0xff]
  %19 = vset.pattern.permute.xlu0 0
  %20 = vperm.xlu0 %19, %v16
  %v21 = vpop.permute.xlu0 %20
  %24 = vset.pattern.permute.xlu0 0
  %25 = vperm.xlu0 %24, %v17
  %v26 = vpop.permute.xlu0 %25
  %v28 = vmul.f32 %v14, %v21
  %v29 = vmul.f32 %v15, %v26
  %v30 = vld [vmem:[%s2] sm:$0xff]
  %v31 = vld [vmem:[%s2 + $0x8] sm:$0xff]
  %33 = vset.pattern.permute.xlu0 0
  %34 = vperm.xlu0 %33, %v30
  %v35 = vpop.permute.xlu0 %34
  %38 = vset.pattern.permute.xlu0 0
  %39 = vperm.xlu0 %38, %v31
  %v40 = vpop.permute.xlu0 %39
  %v42 = vadd.f32 %v28, %v35
  %v43 = vadd.f32 %v29, %v40
  %44 = vst [vmem:[%s3] sm:$0xff] %v42
  %45 = vst [vmem:[%s3 + $0x8] sm:$0xff] %v43
  // Predicated region
  $region14: #{upblock_forward.3} parent=0 // pred_check
    _
  $region15: #{upblock_forward.3} parent=0 // pred_check_branch
    %47 = sbr.rel (0) target = $region17
  $region16: #{upblock_forward.3} parent=0 // pred_region
    _
  $region17: #{upblock_forward.3} parent=0 // pred_fallthru
    _
  // Predicated region
  $region18: #{upblock_forward.3} parent=0 // pred_check
    _
  $region19: #{upblock_forward.3} parent=0 // pred_check_branch
    %49 = sbr.rel (0) target = $region21
  $region20: #{upblock_forward.3} parent=0 // pred_region
    _
  $region21: #{upblock_forward.3} parent=0 // pred_fallthru
    _

// kernel: upblock_forward.2
$region0: #{upblock_forward.2}
  #allocation0 [shape = 'u32[]', space=smem, size = 0x4, offset = 0x4, fixed_abs, tag = 'smem constant byte address 0x4 - core index']
  #allocation1 [shape = 'u32[144,128]{1,0:T(1,128)}', space=vmem, size = 0x12000, scoped, tag = 'internal scratch']
  %s0 = inlined_call_operand.vmem [shape: bf16[16,72], index: 0, kind: input, shape index: {}]
  %s1 = inlined_call_operand.vmem [shape: bf16[72,128], index: 1, kind: input, shape index: {}]
  %s2 = inlined_call_operand.vmem [shape: f32[16,128], index: 2, kind: output, shape index: {0}]
  %s3 = inlined_call_operand.vmem [shape: f32[16,1], index: 3, kind: output, shape index: {1}]
  %s4 = inlined_call_operand.vmem [shape: f32[16,1], index: 4, kind: output, shape index: {2}]
  %5 = xla_tuple %s2, %s3, %s4
  %s6 = sld [smem:[#allocation0]]
  $region38: #{upblock_forward.2} parent=0
    _
  %s8 = ssub.s32 1, %s6
  %s9 = scalar_select 0, %s8, %s6
  // Predicated region
  $region2: #{upblock_forward.2} parent=0 // pred_check
    _
  $region3: #{upblock_forward.2} parent=0 // pred_check_branch
    %11 = sbr.rel (0) target = $region5
  $region4: #{upblock_forward.2} parent=0 // pred_region
    _
  $region5: #{upblock_forward.2} parent=0 // pred_fallthru
    _
  // Predicated region
  $region6: #{upblock_forward.2} parent=0 // pred_check
    _
  $region7: #{upblock_forward.2} parent=0 // pred_check_branch
    %13 = sbr.rel (0) target = $region9
  $region8: #{upblock_forward.2} parent=0 // pred_region
    _
  $region9: #{upblock_forward.2} parent=0 // pred_fallthru
    _
  %p15 = scmp.eq.s32.totalorder 0, 0
  // Predicated region
  $region10: #{upblock_forward.2} parent=0 // pred_check
    %p16 = pneg %p15
  $region11: #{upblock_forward.2} parent=0 // pred_check_branch
    %18 = sbr.rel (%p16) target = $region13
  $region12: #{upblock_forward.2} parent=0 // pred_region
    %vm19 = vcmask 7168
    %20 = vst.msk [vmem:[%s3] sm:$0xff] %vm19, 0.0
    %21 = vst.msk [vmem:[%s3 + $0x8] sm:$0xff] %vm19, 0.0
    %22 = vst.msk [vmem:[%s4] sm:$0xff] %vm19, 0.0
    %23 = vst.msk [vmem:[%s4 + $0x8] sm:$0xff] %vm19, 0.0
  $region13: #{upblock_forward.2} parent=0 // pred_fallthru
    _
  %v24 = vld [vmem:[%s0] sm:$0xf]
  %v25 = vld [vmem:[%s0 + $0x4] sm:$0xf]
  %v26 = vld [vmem:[%s1] sm:$0xf]
  %v27 = vld [vmem:[%s1 + $0x4] sm:$0xf]
  %v28 = vld [vmem:[%s1 + $0x8] sm:$0xf]
  %v29 = vld [vmem:[%s1 + $0xc] sm:$0xf]
  %v30 = vld [vmem:[%s1 + $0x10] sm:$0xf]
  %v31 = vld [vmem:[%s1 + $0x14] sm:$0xf]
  %v32 = vld [vmem:[%s1 + $0x18] sm:$0xf]
  %v33 = vld [vmem:[%s1 + $0x1c] sm:$0xf]
  %v34 = vld [vmem:[%s1 + $0x20] sm:$0xf]
  %v37 = vunpack.c.l.b16 %v24
  %v38 = vunpack.c.l.b16 %v25
  %v39 = vpack.c.b16 %v38, %v37
  %v49 = vunpack.c.l.b16 %v26
  %v50 = vunpack.c.l.b16 %v27
  %v51 = vunpack.c.l.b16 %v28
  %v52 = vunpack.c.l.b16 %v29
  %v53 = vunpack.c.l.b16 %v30
  %v54 = vunpack.c.l.b16 %v31
  %v55 = vunpack.c.l.b16 %v32
  %v56 = vunpack.c.l.b16 %v33
  %v57 = vunpack.c.l.b16 %v34
  %v58 = vpack.c.b16 %v50, %v49
  %v59 = vpack.c.b16 %v52, %v51
  %v60 = vpack.c.b16 %v54, %v53
  %v61 = vpack.c.b16 %v56, %v55
  %v62 = vpack.c.b16 %v57, %v57
  %vm67 = vcmask 588800
  %v69 = vsel %vm67, %v39, 0
  %vm71 = vcmask 1043456
  %v73 = vsel %vm71, %v62, 0
  %75 = vmatprep.subr.bf16.mxu0 0
  %76 = vmatpush1.bf16.msra.mxu0 0
  %77 = vmatprep.subr.bf16.mxu0 0
  %78 = vmatpush1.bf16.msra.mxu0 0
  %79 = vmatprep.subr.bf16.mxu0 0
  %80 = vmatpush1.bf16.msra.mxu0 0
  %81 = vmatprep.subr.bf16.mxu0 0
  %82 = vmatpush1.bf16.msra.mxu0 %v73
  %83 = vmatprep.subr.bf16.mxu0 0
  %84 = vmatpush1.bf16.msra.mxu0 %v61
  %85 = vmatprep.subr.bf16.mxu0 0
  %86 = vmatpush1.bf16.msra.mxu0 %v60
  %87 = vmatprep.subr.bf16.mxu0 0
  %88 = vmatpush1.bf16.msra.mxu0 %v59
  %89 = vmatprep.subr.bf16.mxu0 0
  %90 = vmatpush1.bf16.msra.mxu0 %v58
  %91 = vmatprep.subr.bf16.mxu0 0
  %92 = vmatpush2.bf16.msra.mxu0 0
  %93 = vmatprep.subr.bf16.mxu0 0
  %94 = vmatpush2.bf16.msra.mxu0 0
  %95 = vmatprep.subr.bf16.mxu0 0
  %96 = vmatpush2.bf16.msra.mxu0 0
  %97 = vmatprep.subr.bf16.mxu0 0
  %98 = vmatpush2.bf16.msra.mxu0 0
  %99 = vmatprep.subr.bf16.mxu0 0
  %100 = vmatpush2.bf16.msra.mxu0 0
  %101 = vmatprep.subr.bf16.mxu0 0
  %102 = vmatpush2.bf16.msra.mxu0 0
  %103 = vmatprep.subr.bf16.mxu0 0
  %104 = vmatpush2.bf16.msra.mxu0 0
  %105 = vmatprep.subr.bf16.mxu0 0
  %106 = vmatpush2.bf16.msra.mxu0 0
  %107 = vmatprep.mubr.bf16.mxu0 0
  %108 = vmatmul.mubr.bf16.gmra.mxu0 %v69
  %v109 = vpop.f32.mrf.mxu0
  %v110 = vadd.f32 0.0, %v109
  %v111 = vpop.f32.mrf.mxu0
  %v112 = vpop.f32.mrf.mxu0
  %v113 = vadd.f32 0.0, %v112
  %v114 = vpop.f32.mrf.mxu0
  %115 = vdwg.mxu0
  %116 = vst [vmem:[%s2] sm:$0xff] %v110
  %117 = vst [vmem:[%s2 + $0x8] sm:$0xff] %v113
  %v118 = vld [vmem:[%s2] sm:$0xff]
  %v119 = vld [vmem:[%s2 + $0x8] sm:$0xff]
  %v120 = vld [vmem:[%s3] sm:$0xff]
  %v121 = vld [vmem:[%s3 + $0x8] sm:$0xff]
  %122 = vadd.xlane.f32.xlu0 %v118
  %v123 = vpop.xlane.xlu0 %122
  %124 = vadd.xlane.f32.xlu0 %v119
  %v125 = vpop.xlane.xlu0 %124
  %v126 = vadd.f32 %v120, %v123
  %v127 = vadd.f32 %v121, %v125
  %vm128 = vcmask 7168
  %129 = vst.msk [vmem:[%s3] sm:$0xff] %vm128, %v126
  %130 = vst.msk [vmem:[%s3 + $0x8] sm:$0xff] %vm128, %v127
  %v131 = vld [vmem:[%s4] sm:$0xff]
  %v132 = vld [vmem:[%s4 + $0x8] sm:$0xff]
  %v133 = vmul.f32 %v118, %v118
  %v134 = vmul.f32 %v119, %v119
  %135 = vadd.xlane.f32.xlu0 %v133
  %v136 = vpop.xlane.xlu0 %135
  %137 = vadd.xlane.f32.xlu0 %v134
  %v138 = vpop.xlane.xlu0 %137
  %v139 = vadd.f32 %v131, %v136
  %v140 = vadd.f32 %v132, %v138
  %141 = vst.msk [vmem:[%s4] sm:$0xff] %vm128, %v139
  %142 = vst.msk [vmem:[%s4 + $0x8] sm:$0xff] %vm128, %v140
  // Predicated region
  $region14: #{upblock_forward.2} parent=0 // pred_check
    _
  $region15: #{upblock_forward.2} parent=0 // pred_check_branch
    %144 = sbr.rel (0) target = $region17
  $region16: #{upblock_forward.2} parent=0 // pred_region
    _
  $region17: #{upblock_forward.2} parent=0 // pred_fallthru
    _
  // Predicated region
  $region18: #{upblock_forward.2} parent=0 // pred_check
    _
  $region19: #{upblock_forward.2} parent=0 // pred_check_branch
    %146 = sbr.rel (0) target = $region21
  $region20: #{upblock_forward.2} parent=0 // pred_region
    _
  $region21: #{upblock_forward.2} parent=0 // pred_fallthru
    _
  // Predicated region
  $region22: #{upblock_forward.2} parent=0 // pred_check
    _
  $region23: #{upblock_forward.2} parent=0 // pred_check_branch
    %148 = sbr.rel (0) target = $region25
  $region24: #{upblock_forward.2} parent=0 // pred_region
    _
  $region25: #{upblock_forward.2} parent=0 // pred_fallthru
    _
  // Predicated region
  $region26: #{upblock_forward.2} parent=0 // pred_check
    _
  $region27: #{upblock_forward.2} parent=0 // pred_check_branch
    %150 = sbr.rel (0) target = $region29
  $region28: #{upblock_forward.2} parent=0 // pred_region
    _
  $region29: #{upblock_forward.2} parent=0 // pred_fallthru
    _
  // Predicated region
  $region30: #{upblock_forward.2} parent=0 // pred_check
    _
  $region31: #{upblock_forward.2} parent=0 // pred_check_branch
    %152 = sbr.rel (0) target = $region33
  $region32: #{upblock_forward.2} parent=0 // pred_region
    _
  $region33: #{upblock_forward.2} parent=0 // pred_fallthru
    _
  // Predicated region
  $region34: #{upblock_forward.2} parent=0 // pred_check
    _
  $region35: #{upblock_forward.2} parent=0 // pred_check_branch
    %154 = sbr.rel (0) target = $region37
  $region36: #{upblock_forward.2} parent=0 // pred_region
    _
  $region37: #{upblock_forward.2} parent=0 // pred_fallthru
    _

</llo_original>
